<compile_context>
chip_gen: v7x
topology: tpu7x:2x2x1
jax: 0.10.0
libtpu: 0.0.40
codegen_flags: <defaults>
</compile_context>

<pallas_src>
import jax
import jax.numpy as jnp
from jax import lax
from jax.experimental import pallas as pl
from jax.experimental.pallas import tpu as pltpu


def _ln(x, g, b, eps=1e-5):
    """LayerNorm over the last (lane) dim; biased variance like torch."""
    mu = jnp.mean(x, axis=-1, keepdims=True)
    var = jnp.mean(jnp.square(x - mu), axis=-1, keepdims=True)
    return (x - mu) * lax.rsqrt(var + eps) * g + b


def fused_decode_kernel(xrep_ref, s1_ref, s2b_ref, mask_ref,
                        w1_ref, wo1_ref, vec1_ref,
                        w2_ref, wo2_ref, vec2_ref,
                        o_ref):
    """Whole batch, both MAB stages, one grid-less invocation."""
    f32 = jnp.float32
    x = xrep_ref[...].astype(f32)         # (B*Nq1, Din)   X rows repeated Nq1 times
    s1 = s1_ref[...].astype(f32)          # (B*Nq1, 1)     S1 tiled over batch
    s2b = s2b_ref[...].astype(f32)        # (B*Np, B*Nq1)  block-diagonal S2
    mask = mask_ref[...].astype(f32)      # (B*Np, B*Nq1)  0 in-block / -1e30 cross-batch

    dout = wo1_ref.shape[0]
    din = wo2_ref.shape[0]

    # ---- stage-1 parameters (lane-packed) ----
    w1 = w1_ref[...]                      # (Din, 2*Dout) = [Wq1 | Wv1]
    wo1 = wo1_ref[...]                    # (Dout, Dout)
    v1c = vec1_ref[...]                   # (7, Dout)
    bq1, bv1, bo1 = v1c[0:1], v1c[1:2], v1c[2:3]
    g01, b01, g11, b11 = v1c[3:4], v1c[4:5], v1c[5:6], v1c[6:7]

    # ---- stage-2 parameters (lane-packed; Wk/bk pre-scaled by 1/sqrt(dim_V)) ----
    w2 = w2_ref[...]                      # (Dout, 3*Din) = [Wq2 | Wk2*inv | Wv2]
    wo2 = wo2_ref[...]                    # (Din, Din)
    v2c = vec2_ref[...]                   # (8, Din)
    bq2, bk2, bv2, bo2 = v2c[0:1], v2c[1:2], v2c[2:3], v2c[3:4]
    g02, b02, g12, b12 = v2c[4:5], v2c[5:6], v2c[6:7], v2c[7:8]

    # ---------- MAB 1 (single key => softmax == 1, O = Q_ + V_) ----------
    # fc_q(S1 @ X[b]) = s1 * (X[b] @ Wq1) + bq1 (associativity; X[b] is 1 row),
    # so the whole batch is one (B*Nq1, Din) @ (Din, 2*Dout) matmul + lane slices.
    xqv = jnp.dot(x, w1, preferred_element_type=f32)          # MXU #1
    xq = xqv[:, :dout]
    v1 = xqv[:, dout:] + bv1                                   # fc_v(X) rows, repeated
    q1 = s1 * xq + bq1                                         # fc_q(Q1) rows
    o1 = _ln(q1 + v1, g01, b01)
    h1 = jnp.dot(o1, wo1, preferred_element_type=f32) + bo1    # MXU #2
    o1 = _ln(o1 + jax.nn.relu(h1), g11, b11)                   # (B*Nq1, Dout)

    # ---------- MAB 2 ----------
    # Fused q/k/v projection of the batch-stacked keys/values.
    qkv = jnp.dot(o1, w2, preferred_element_type=f32)          # MXU #3, (B*Nq1, 3*Din)
    pq = qkv[:, :din]                                          # o1 @ Wq2 (no bias yet)
    k2 = qkv[:, din:2 * din] + bk2                             # pre-scaled keys
    v2 = qkv[:, 2 * din:] + bv2

    # q2 = S2_blockdiag @ (o1 @ Wq2) + bq2 : K = B*Nq1 (=4) is far too small for
    # the MXU -> unrolled VPU rank-1 broadcast-FMAs.
    nj = pq.shape[0]
    q2 = s2b[:, 0:1] * pq[0:1, :] + bq2                        # (B*Np, Din)
    for j in range(1, nj):
        q2 = q2 + s2b[:, j:j + 1] * pq[j:j + 1, :]

    # Joint logits over all (batch, key) pairs, cross-batch pairs masked out.
    # Contract last-vs-last axes: no XLU transpose of a lane-padded tile.
    logits = lax.dot_general(q2, k2, (((1,), (1,)), ((), ())),
                             preferred_element_type=f32) + mask  # MXU #4, (B*Np, B*Nq1)
    m = jnp.max(logits, axis=-1, keepdims=True)
    p = jnp.exp(logits - m)
    attn = p / jnp.sum(p, axis=-1, keepdims=True)              # exact softmax

    # O = Q_ + A @ V_ : again K = 4 -> VPU rank-1 updates (masked cols are 0).
    o2 = q2
    for j in range(nj):
        o2 = o2 + attn[:, j:j + 1] * v2[j:j + 1, :]

    o2 = _ln(o2, g02, b02)
    h2 = jnp.dot(o2, wo2, preferred_element_type=f32) + bo2    # MXU #5
    o2 = _ln(o2 + jax.nn.relu(h2), g12, b12)                   # (B*Np, Din)

    o_ref[...] = o2.astype(o_ref.dtype)                        # single full-block store


def graph_transformer_decode_s2(X, params, *rel_args, attention_mask=None, graph=None):
    """X: (B, 1, dim_in).  Returns (B, num_point, dim_in).

    rel_args / attention_mask / graph are accepted for signature parity with the
    PyTorch module; see TODO at top of file."""
    B, n_nodes, dim_in = X.shape
    s1, s2 = params["S1"], params["S2"]
    assert n_nodes == 1 and s1.shape[1] == 1, "decoder expects a single global node"
    p1, p2 = params["mab_liner"], params["mab_graph"]
    num_point = s2.shape[0]
    nq1 = s1.shape[0]

    # Wrapper-side packing (tiny one-time ops):
    #   stage 1: [Wq1 | Wv1] lane-concat + bias/LN slab (Wk1/bk1 dead: 1-key softmax)
    #   stage 2: [Wq2 | Wk2*inv | Wv2] lane-concat + bias/LN slab (scale folded in)
    inv_scale = 1.0 / jnp.sqrt(jnp.float32(p2["wq"].shape[1]))
    w1 = jnp.concatenate([p1["wq"], p1["wv"]], axis=1)                    # (Din, 2*Dout)
    vec1 = jnp.concatenate([p1["bq"], p1["bv"], p1["bo"],
                            p1["g0"], p1["b0"], p1["g1"], p1["b1"]], axis=0)   # (7, Dout)
    w2 = jnp.concatenate([p2["wq"], p2["wk"] * inv_scale, p2["wv"]], axis=1)  # (Dout, 3*Din)
    vec2 = jnp.concatenate([p2["bq"], p2["bk"] * inv_scale, p2["bv"], p2["bo"],
                            p2["g0"], p2["b0"], p2["g1"], p2["b1"]], axis=0)  # (8, Din)

    # Batch folded onto the sublane axis: repeat X rows per query, tile S1,
    # block-diagonal S2 and an additive mask so the joint softmax == per-batch.
    x_rep = jnp.repeat(X.reshape(B, dim_in), nq1, axis=0)                 # (B*Nq1, Din)
    s1_tiled = jnp.tile(s1, (B, 1))                                       # (B*Nq1, 1)
    eye_b = jnp.eye(B, dtype=jnp.float32)
    s2_big = jnp.kron(eye_b, s2.astype(jnp.float32))                      # (B*Np, B*Nq1)
    in_block = jnp.kron(eye_b, jnp.ones((num_point, nq1), jnp.float32))
    mask = (1.0 - in_block) * jnp.float32(-1e30)                          # (B*Np, B*Nq1)

    vmem = pl.BlockSpec(memory_space=pltpu.MemorySpace.VMEM)
    out2d = pl.pallas_call(
        fused_decode_kernel,
        in_specs=[vmem] * 10,
        out_specs=vmem,
        out_shape=jax.ShapeDtypeStruct((B * num_point, dim_in), jnp.float32),
    )(x_rep, s1_tiled, s2_big, mask, w1, p1["wo"], vec1, w2, p2["wo"], vec2)
    return out2d.reshape(B, num_point, dim_in)


def _init_mab_params(key, dim_q, dim_v):
    ks = jax.random.split(key, 4)
    scale_q = 1.0 / jnp.sqrt(dim_q)
    scale_v = 1.0 / jnp.sqrt(dim_v)
    return {
        "wq": jax.random.normal(ks[0], (dim_q, dim_v), jnp.float32) * scale_q,
        "bq": jnp.zeros((1, dim_v), jnp.float32),
        "wk": jax.random.normal(ks[1], (dim_q, dim_v), jnp.float32) * scale_q,
        "bk": jnp.zeros((1, dim_v), jnp.float32),
        "wv": jax.random.normal(ks[2], (dim_q, dim_v), jnp.float32) * scale_q,
        "bv": jnp.zeros((1, dim_v), jnp.float32),
        "wo": jax.random.normal(ks[3], (dim_v, dim_v), jnp.float32) * scale_v,
        "bo": jnp.zeros((1, dim_v), jnp.float32),
        "g0": jnp.ones((1, dim_v), jnp.float32),
        "b0": jnp.zeros((1, dim_v), jnp.float32),
        "g1": jnp.ones((1, dim_v), jnp.float32),
        "b1": jnp.zeros((1, dim_v), jnp.float32),
    }


def init_params(key, num_point, dim_in, dim_out):
    k_s1, k_s2, k_m1, k_m2 = jax.random.split(key, 4)
    return {
        # nn.Parameter(torch.Tensor(2, 1)) / (num_point, 2): synthetic normal init.
        "S1": jax.random.normal(k_s1, (2, 1), jnp.float32),
        "S2": jax.random.normal(k_s2, (num_point, 2), jnp.float32),
        # mab_liner: dim_Q = dim_K = dim_in, dim_V = dim_out
        "mab_liner": _init_mab_params(k_m1, dim_in, dim_out),
        # mab_graph: dim_Q = dim_K = dim_out, dim_V = dim_in
        "mab_graph": _init_mab_params(k_m2, dim_out, dim_in),
    }


if __name__ == "__main__":
    key = jax.random.PRNGKey(0)
    B, num_point, dim_in, dim_out = 2, 8, 32, 16

    k_params, k_x = jax.random.split(key)
    params = init_params(k_params, num_point, dim_in, dim_out)

    # X: (B, 1, dim_in) single "global" node per batch element that gets decoded
    # up to `num_point` nodes.
    X = jax.random.normal(k_x, (B, 1, dim_in), jnp.float32)

    # Placeholder rel*/mask/graph inputs (unused; see TODO at top of file).
    relrec = jnp.zeros((num_point * (num_point - 1), num_point), jnp.float32)
    relsend = jnp.zeros_like(relrec)

    fwd = jax.jit(graph_transformer_decode_s2)
    out = fwd(X, params, relrec, relsend, relrec, relsend, relrec, relsend)
    jax.block_until_ready(out)

    assert out.shape == (B, num_point, dim_in), out.shape
    assert bool(jnp.all(jnp.isfinite(out)))
    print("KERNEL_OK")
</pallas_src>

<mosaic_0001>
module attributes {stable_mosaic.version = 11 : i64} {
  func.func @fused_decode_kernel(%arg0: memref<4x32xf32, #tpu.memory_space<vmem>>, %arg1: memref<4x1xf32, #tpu.memory_space<vmem>>, %arg2: memref<16x4xf32, #tpu.memory_space<vmem>>, %arg3: memref<16x4xf32, #tpu.memory_space<vmem>>, %arg4: memref<32x32xf32, #tpu.memory_space<vmem>>, %arg5: memref<16x16xf32, #tpu.memory_space<vmem>>, %arg6: memref<7x16xf32, #tpu.memory_space<vmem>>, %arg7: memref<16x96xf32, #tpu.memory_space<vmem>>, %arg8: memref<32x32xf32, #tpu.memory_space<vmem>>, %arg9: memref<8x32xf32, #tpu.memory_space<vmem>>, %arg10: memref<16x32xf32, #tpu.memory_space<vmem>>) attributes {dimension_semantics = [], scalar_prefetch = 0 : i64, scratch_operands = 0 : i64, tpu.core_type = #tpu.core_type<tc>} {
    %c0 = arith.constant 0 : index
    %c0_0 = arith.constant 0 : index
    %0 = vector.load %arg0[%c0, %c0_0] : memref<4x32xf32, #tpu.memory_space<vmem>>, vector<4x32xf32>
    %c0_1 = arith.constant 0 : index
    %c0_2 = arith.constant 0 : index
    %1 = vector.load %arg1[%c0_1, %c0_2] : memref<4x1xf32, #tpu.memory_space<vmem>>, vector<4x1xf32>
    %c0_3 = arith.constant 0 : index
    %c0_4 = arith.constant 0 : index
    %2 = vector.load %arg2[%c0_3, %c0_4] : memref<16x4xf32, #tpu.memory_space<vmem>>, vector<16x4xf32>
    %c0_5 = arith.constant 0 : index
    %c0_6 = arith.constant 0 : index
    %3 = vector.load %arg3[%c0_5, %c0_6] : memref<16x4xf32, #tpu.memory_space<vmem>>, vector<16x4xf32>
    %c0_7 = arith.constant 0 : index
    %c0_8 = arith.constant 0 : index
    %4 = vector.load %arg4[%c0_7, %c0_8] : memref<32x32xf32, #tpu.memory_space<vmem>>, vector<32x32xf32>
    %c0_9 = arith.constant 0 : index
    %c0_10 = arith.constant 0 : index
    %5 = vector.load %arg5[%c0_9, %c0_10] : memref<16x16xf32, #tpu.memory_space<vmem>>, vector<16x16xf32>
    %c0_11 = arith.constant 0 : index
    %c0_12 = arith.constant 0 : index
    %6 = vector.load %arg6[%c0_11, %c0_12] : memref<7x16xf32, #tpu.memory_space<vmem>>, vector<7x16xf32>
    %7 = vector.extract_strided_slice %6 {offsets = [0, 0], sizes = [1, 16], strides = [1, 1]} : vector<7x16xf32> to vector<1x16xf32>
    %8 = vector.extract_strided_slice %6 {offsets = [1, 0], sizes = [1, 16], strides = [1, 1]} : vector<7x16xf32> to vector<1x16xf32>
    %9 = vector.extract_strided_slice %6 {offsets = [2, 0], sizes = [1, 16], strides = [1, 1]} : vector<7x16xf32> to vector<1x16xf32>
    %10 = vector.extract_strided_slice %6 {offsets = [3, 0], sizes = [1, 16], strides = [1, 1]} : vector<7x16xf32> to vector<1x16xf32>
    %11 = vector.extract_strided_slice %6 {offsets = [4, 0], sizes = [1, 16], strides = [1, 1]} : vector<7x16xf32> to vector<1x16xf32>
    %12 = vector.extract_strided_slice %6 {offsets = [5, 0], sizes = [1, 16], strides = [1, 1]} : vector<7x16xf32> to vector<1x16xf32>
    %13 = vector.extract_strided_slice %6 {offsets = [6, 0], sizes = [1, 16], strides = [1, 1]} : vector<7x16xf32> to vector<1x16xf32>
    %c0_13 = arith.constant 0 : index
    %c0_14 = arith.constant 0 : index
    %14 = vector.load %arg7[%c0_13, %c0_14] : memref<16x96xf32, #tpu.memory_space<vmem>>, vector<16x96xf32>
    %c0_15 = arith.constant 0 : index
    %c0_16 = arith.constant 0 : index
    %15 = vector.load %arg8[%c0_15, %c0_16] : memref<32x32xf32, #tpu.memory_space<vmem>>, vector<32x32xf32>
    %c0_17 = arith.constant 0 : index
    %c0_18 = arith.constant 0 : index
    %16 = vector.load %arg9[%c0_17, %c0_18] : memref<8x32xf32, #tpu.memory_space<vmem>>, vector<8x32xf32>
    %17 = vector.extract_strided_slice %16 {offsets = [0, 0], sizes = [1, 32], strides = [1, 1]} : vector<8x32xf32> to vector<1x32xf32>
    %18 = vector.extract_strided_slice %16 {offsets = [1, 0], sizes = [1, 32], strides = [1, 1]} : vector<8x32xf32> to vector<1x32xf32>
    %19 = vector.extract_strided_slice %16 {offsets = [2, 0], sizes = [1, 32], strides = [1, 1]} : vector<8x32xf32> to vector<1x32xf32>
    %20 = vector.extract_strided_slice %16 {offsets = [3, 0], sizes = [1, 32], strides = [1, 1]} : vector<8x32xf32> to vector<1x32xf32>
    %21 = vector.extract_strided_slice %16 {offsets = [4, 0], sizes = [1, 32], strides = [1, 1]} : vector<8x32xf32> to vector<1x32xf32>
    %22 = vector.extract_strided_slice %16 {offsets = [5, 0], sizes = [1, 32], strides = [1, 1]} : vector<8x32xf32> to vector<1x32xf32>
    %23 = vector.extract_strided_slice %16 {offsets = [6, 0], sizes = [1, 32], strides = [1, 1]} : vector<8x32xf32> to vector<1x32xf32>
    %24 = vector.extract_strided_slice %16 {offsets = [7, 0], sizes = [1, 32], strides = [1, 1]} : vector<8x32xf32> to vector<1x32xf32>
    %cst = arith.constant dense<0.000000e+00> : vector<4x32xf32>
    %25 = tpu.matmul %0, %4, %cst {dimension_numbers = #tpu.dot_dimension_numbers<[1], [0], [0], [1], [0, 0, 1, 1], [], []>} : vector<4x32xf32>, vector<32x32xf32>, vector<4x32xf32> -> vector<4x32xf32>
    %26 = vector.extract_strided_slice %25 {offsets = [0, 0], sizes = [4, 16], strides = [1, 1]} : vector<4x32xf32> to vector<4x16xf32>
    %27 = vector.extract_strided_slice %25 {offsets = [0, 16], sizes = [4, 16], strides = [1, 1]} : vector<4x32xf32> to vector<4x16xf32>
    %28 = vector.broadcast %8 : vector<1x16xf32> to vector<4x16xf32>
    %29 = arith.addf %27, %28 : vector<4x16xf32>
    %30 = vector.broadcast %1 : vector<4x1xf32> to vector<4x16xf32>
    %31 = arith.mulf %30, %26 : vector<4x16xf32>
    %32 = vector.broadcast %7 : vector<1x16xf32> to vector<4x16xf32>
    %33 = arith.addf %31, %32 : vector<4x16xf32>
    %34 = arith.addf %33, %29 : vector<4x16xf32>
    %cst_19 = arith.constant dense<0.000000e+00> : vector<4xf32>
    %35 = vector.multi_reduction <add>, %34, %cst_19 [1] : vector<4x16xf32> to vector<4xf32>
    %36 = vector.shape_cast %35 : vector<4xf32> to vector<4x1xf32>
    %cst_20 = arith.constant 1.600000e+01 : f32
    %37 = vector.broadcast %cst_20 : f32 to vector<4x1xf32>
    %38 = arith.divf %36, %37 : vector<4x1xf32>
    %39 = vector.broadcast %38 : vector<4x1xf32> to vector<4x16xf32>
    %40 = arith.subf %34, %39 : vector<4x16xf32>
    %41 = arith.mulf %40, %40 : vector<4x16xf32>
    %cst_21 = arith.constant dense<0.000000e+00> : vector<4xf32>
    %42 = vector.multi_reduction <add>, %41, %cst_21 [1] : vector<4x16xf32> to vector<4xf32>
    %43 = vector.shape_cast %42 : vector<4xf32> to vector<4x1xf32>
    %cst_22 = arith.constant 1.600000e+01 : f32
    %44 = vector.broadcast %cst_22 : f32 to vector<4x1xf32>
    %45 = arith.divf %43, %44 : vector<4x1xf32>
    %46 = vector.broadcast %38 : vector<4x1xf32> to vector<4x16xf32>
    %47 = arith.subf %34, %46 : vector<4x16xf32>
    %cst_23 = arith.constant 9.99999974E-6 : f32
    %48 = vector.broadcast %cst_23 : f32 to vector<4x1xf32>
    %49 = arith.addf %45, %48 : vector<4x1xf32>
    %50 = math.rsqrt %49 : vector<4x1xf32>
    %51 = vector.broadcast %50 : vector<4x1xf32> to vector<4x16xf32>
    %52 = arith.mulf %47, %51 : vector<4x16xf32>
    %53 = vector.broadcast %10 : vector<1x16xf32> to vector<4x16xf32>
    %54 = arith.mulf %52, %53 : vector<4x16xf32>
    %55 = vector.broadcast %11 : vector<1x16xf32> to vector<4x16xf32>
    %56 = arith.addf %54, %55 : vector<4x16xf32>
    %cst_24 = arith.constant dense<0.000000e+00> : vector<4x16xf32>
    %57 = tpu.matmul %56, %5, %cst_24 {dimension_numbers = #tpu.dot_dimension_numbers<[1], [0], [0], [1], [0, 0, 1, 1], [], []>} : vector<4x16xf32>, vector<16x16xf32>, vector<4x16xf32> -> vector<4x16xf32>
    %58 = vector.broadcast %9 : vector<1x16xf32> to vector<4x16xf32>
    %59 = arith.addf %57, %58 : vector<4x16xf32>
    %cst_25 = arith.constant 0.000000e+00 : f32
    %60 = vector.broadcast %cst_25 : f32 to vector<4x16xf32>
    %61 = arith.maximumf %59, %60 : vector<4x16xf32>
    %62 = arith.addf %56, %61 : vector<4x16xf32>
    %cst_26 = arith.constant dense<0.000000e+00> : vector<4xf32>
    %63 = vector.multi_reduction <add>, %62, %cst_26 [1] : vector<4x16xf32> to vector<4xf32>
    %64 = vector.shape_cast %63 : vector<4xf32> to vector<4x1xf32>
    %cst_27 = arith.constant 1.600000e+01 : f32
    %65 = vector.broadcast %cst_27 : f32 to vector<4x1xf32>
    %66 = arith.divf %64, %65 : vector<4x1xf32>
    %67 = vector.broadcast %66 : vector<4x1xf32> to vector<4x16xf32>
    %68 = arith.subf %62, %67 : vector<4x16xf32>
    %69 = arith.mulf %68, %68 : vector<4x16xf32>
    %cst_28 = arith.constant dense<0.000000e+00> : vector<4xf32>
    %70 = vector.multi_reduction <add>, %69, %cst_28 [1] : vector<4x16xf32> to vector<4xf32>
    %71 = vector.shape_cast %70 : vector<4xf32> to vector<4x1xf32>
    %cst_29 = arith.constant 1.600000e+01 : f32
    %72 = vector.broadcast %cst_29 : f32 to vector<4x1xf32>
    %73 = arith.divf %71, %72 : vector<4x1xf32>
    %74 = vector.broadcast %66 : vector<4x1xf32> to vector<4x16xf32>
    %75 = arith.subf %62, %74 : vector<4x16xf32>
    %cst_30 = arith.constant 9.99999974E-6 : f32
    %76 = vector.broadcast %cst_30 : f32 to vector<4x1xf32>
    %77 = arith.addf %73, %76 : vector<4x1xf32>
    %78 = math.rsqrt %77 : vector<4x1xf32>
    %79 = vector.broadcast %78 : vector<4x1xf32> to vector<4x16xf32>
    %80 = arith.mulf %75, %79 : vector<4x16xf32>
    %81 = vector.broadcast %12 : vector<1x16xf32> to vector<4x16xf32>
    %82 = arith.mulf %80, %81 : vector<4x16xf32>
    %83 = vector.broadcast %13 : vector<1x16xf32> to vector<4x16xf32>
    %84 = arith.addf %82, %83 : vector<4x16xf32>
    %cst_31 = arith.constant dense<0.000000e+00> : vector<4x96xf32>
    %85 = tpu.matmul %84, %14, %cst_31 {dimension_numbers = #tpu.dot_dimension_numbers<[1], [0], [0], [1], [0, 0, 1, 1], [], []>} : vector<4x16xf32>, vector<16x96xf32>, vector<4x96xf32> -> vector<4x96xf32>
    %86 = vector.extract_strided_slice %85 {offsets = [0, 0], sizes = [4, 32], strides = [1, 1]} : vector<4x96xf32> to vector<4x32xf32>
    %87 = vector.extract_strided_slice %85 {offsets = [0, 32], sizes = [4, 32], strides = [1, 1]} : vector<4x96xf32> to vector<4x32xf32>
    %88 = vector.broadcast %18 : vector<1x32xf32> to vector<4x32xf32>
    %89 = arith.addf %87, %88 : vector<4x32xf32>
    %90 = vector.extract_strided_slice %85 {offsets = [0, 64], sizes = [4, 32], strides = [1, 1]} : vector<4x96xf32> to vector<4x32xf32>
    %91 = vector.broadcast %19 : vector<1x32xf32> to vector<4x32xf32>
    %92 = arith.addf %90, %91 : vector<4x32xf32>
    %93 = vector.extract_strided_slice %2 {offsets = [0, 0], sizes = [16, 1], strides = [1, 1]} : vector<16x4xf32> to vector<16x1xf32>
    %94 = vector.extract_strided_slice %86 {offsets = [0, 0], sizes = [1, 32], strides = [1, 1]} : vector<4x32xf32> to vector<1x32xf32>
    %95 = vector.broadcast %93 : vector<16x1xf32> to vector<16x32xf32>
    %96 = vector.broadcast %94 : vector<1x32xf32> to vector<16x32xf32>
    %97 = arith.mulf %95, %96 : vector<16x32xf32>
    %98 = vector.broadcast %17 : vector<1x32xf32> to vector<16x32xf32>
    %99 = arith.addf %97, %98 : vector<16x32xf32>
    %100 = vector.extract_strided_slice %2 {offsets = [0, 1], sizes = [16, 1], strides = [1, 1]} : vector<16x4xf32> to vector<16x1xf32>
    %101 = vector.extract_strided_slice %86 {offsets = [1, 0], sizes = [1, 32], strides = [1, 1]} : vector<4x32xf32> to vector<1x32xf32>
    %102 = vector.broadcast %100 : vector<16x1xf32> to vector<16x32xf32>
    %103 = vector.broadcast %101 : vector<1x32xf32> to vector<16x32xf32>
    %104 = arith.mulf %102, %103 : vector<16x32xf32>
    %105 = arith.addf %99, %104 : vector<16x32xf32>
    %106 = vector.extract_strided_slice %2 {offsets = [0, 2], sizes = [16, 1], strides = [1, 1]} : vector<16x4xf32> to vector<16x1xf32>
    %107 = vector.extract_strided_slice %86 {offsets = [2, 0], sizes = [1, 32], strides = [1, 1]} : vector<4x32xf32> to vector<1x32xf32>
    %108 = vector.broadcast %106 : vector<16x1xf32> to vector<16x32xf32>
    %109 = vector.broadcast %107 : vector<1x32xf32> to vector<16x32xf32>
    %110 = arith.mulf %108, %109 : vector<16x32xf32>
    %111 = arith.addf %105, %110 : vector<16x32xf32>
    %112 = vector.extract_strided_slice %2 {offsets = [0, 3], sizes = [16, 1], strides = [1, 1]} : vector<16x4xf32> to vector<16x1xf32>
    %113 = vector.extract_strided_slice %86 {offsets = [3, 0], sizes = [1, 32], strides = [1, 1]} : vector<4x32xf32> to vector<1x32xf32>
    %114 = vector.broadcast %112 : vector<16x1xf32> to vector<16x32xf32>
    %115 = vector.broadcast %113 : vector<1x32xf32> to vector<16x32xf32>
    %116 = arith.mulf %114, %115 : vector<16x32xf32>
    %117 = arith.addf %111, %116 : vector<16x32xf32>
    %cst_32 = arith.constant dense<0.000000e+00> : vector<16x4xf32>
    %118 = tpu.matmul %117, %89, %cst_32 {dimension_numbers = #tpu.dot_dimension_numbers<[1], [1], [0], [0], [0, 0, 1, 0], [], []>} : vector<16x32xf32>, vector<4x32xf32>, vector<16x4xf32> -> vector<16x4xf32>
    %119 = arith.addf %118, %3 : vector<16x4xf32>
    %cst_33 = arith.constant dense<0xFF800000> : vector<16xf32>
    %120 = vector.multi_reduction <maximumf>, %119, %cst_33 [1] : vector<16x4xf32> to vector<16xf32>
    %121 = vector.shape_cast %120 : vector<16xf32> to vector<16x1xf32>
    %122 = vector.broadcast %121 : vector<16x1xf32> to vector<16x4xf32>
    %123 = arith.subf %119, %122 : vector<16x4xf32>
    %124 = math.exp %123 : vector<16x4xf32>
    %cst_34 = arith.constant dense<0.000000e+00> : vector<16xf32>
    %125 = vector.multi_reduction <add>, %124, %cst_34 [1] : vector<16x4xf32> to vector<16xf32>
    %126 = vector.shape_cast %125 : vector<16xf32> to vector<16x1xf32>
    %127 = vector.broadcast %126 : vector<16x1xf32> to vector<16x4xf32>
    %128 = arith.divf %124, %127 : vector<16x4xf32>
    %129 = vector.extract_strided_slice %128 {offsets = [0, 0], sizes = [16, 1], strides = [1, 1]} : vector<16x4xf32> to vector<16x1xf32>
    %130 = vector.extract_strided_slice %92 {offsets = [0, 0], sizes = [1, 32], strides = [1, 1]} : vector<4x32xf32> to vector<1x32xf32>
    %131 = vector.broadcast %129 : vector<16x1xf32> to vector<16x32xf32>
    %132 = vector.broadcast %130 : vector<1x32xf32> to vector<16x32xf32>
    %133 = arith.mulf %131, %132 : vector<16x32xf32>
    %134 = arith.addf %117, %133 : vector<16x32xf32>
    %135 = vector.extract_strided_slice %128 {offsets = [0, 1], sizes = [16, 1], strides = [1, 1]} : vector<16x4xf32> to vector<16x1xf32>
    %136 = vector.extract_strided_slice %92 {offsets = [1, 0], sizes = [1, 32], strides = [1, 1]} : vector<4x32xf32> to vector<1x32xf32>
    %137 = vector.broadcast %135 : vector<16x1xf32> to vector<16x32xf32>
    %138 = vector.broadcast %136 : vector<1x32xf32> to vector<16x32xf32>
    %139 = arith.mulf %137, %138 : vector<16x32xf32>
    %140 = arith.addf %134, %139 : vector<16x32xf32>
    %141 = vector.extract_strided_slice %128 {offsets = [0, 2], sizes = [16, 1], strides = [1, 1]} : vector<16x4xf32> to vector<16x1xf32>
    %142 = vector.extract_strided_slice %92 {offsets = [2, 0], sizes = [1, 32], strides = [1, 1]} : vector<4x32xf32> to vector<1x32xf32>
    %143 = vector.broadcast %141 : vector<16x1xf32> to vector<16x32xf32>
    %144 = vector.broadcast %142 : vector<1x32xf32> to vector<16x32xf32>
    %145 = arith.mulf %143, %144 : vector<16x32xf32>
    %146 = arith.addf %140, %145 : vector<16x32xf32>
    %147 = vector.extract_strided_slice %128 {offsets = [0, 3], sizes = [16, 1], strides = [1, 1]} : vector<16x4xf32> to vector<16x1xf32>
    %148 = vector.extract_strided_slice %92 {offsets = [3, 0], sizes = [1, 32], strides = [1, 1]} : vector<4x32xf32> to vector<1x32xf32>
    %149 = vector.broadcast %147 : vector<16x1xf32> to vector<16x32xf32>
    %150 = vector.broadcast %148 : vector<1x32xf32> to vector<16x32xf32>
    %151 = arith.mulf %149, %150 : vector<16x32xf32>
    %152 = arith.addf %146, %151 : vector<16x32xf32>
    %cst_35 = arith.constant dense<0.000000e+00> : vector<16xf32>
    %153 = vector.multi_reduction <add>, %152, %cst_35 [1] : vector<16x32xf32> to vector<16xf32>
    %154 = vector.shape_cast %153 : vector<16xf32> to vector<16x1xf32>
    %cst_36 = arith.constant 3.200000e+01 : f32
    %155 = vector.broadcast %cst_36 : f32 to vector<16x1xf32>
    %156 = arith.divf %154, %155 : vector<16x1xf32>
    %157 = vector.broadcast %156 : vector<16x1xf32> to vector<16x32xf32>
    %158 = arith.subf %152, %157 : vector<16x32xf32>
    %159 = arith.mulf %158, %158 : vector<16x32xf32>
    %cst_37 = arith.constant dense<0.000000e+00> : vector<16xf32>
    %160 = vector.multi_reduction <add>, %159, %cst_37 [1] : vector<16x32xf32> to vector<16xf32>
    %161 = vector.shape_cast %160 : vector<16xf32> to vector<16x1xf32>
    %cst_38 = arith.constant 3.200000e+01 : f32
    %162 = vector.broadcast %cst_38 : f32 to vector<16x1xf32>
    %163 = arith.divf %161, %162 : vector<16x1xf32>
    %164 = vector.broadcast %156 : vector<16x1xf32> to vector<16x32xf32>
    %165 = arith.subf %152, %164 : vector<16x32xf32>
    %cst_39 = arith.constant 9.99999974E-6 : f32
    %166 = vector.broadcast %cst_39 : f32 to vector<16x1xf32>
    %167 = arith.addf %163, %166 : vector<16x1xf32>
    %168 = math.rsqrt %167 : vector<16x1xf32>
    %169 = vector.broadcast %168 : vector<16x1xf32> to vector<16x32xf32>
    %170 = arith.mulf %165, %169 : vector<16x32xf32>
    %171 = vector.broadcast %21 : vector<1x32xf32> to vector<16x32xf32>
    %172 = arith.mulf %170, %171 : vector<16x32xf32>
    %173 = vector.broadcast %22 : vector<1x32xf32> to vector<16x32xf32>
    %174 = arith.addf %172, %173 : vector<16x32xf32>
    %cst_40 = arith.constant dense<0.000000e+00> : vector<16x32xf32>
    %175 = tpu.matmul %174, %15, %cst_40 {dimension_numbers = #tpu.dot_dimension_numbers<[1], [0], [0], [1], [0, 0, 1, 1], [], []>} : vector<16x32xf32>, vector<32x32xf32>, vector<16x32xf32> -> vector<16x32xf32>
    %176 = vector.broadcast %20 : vector<1x32xf32> to vector<16x32xf32>
    %177 = arith.addf %175, %176 : vector<16x32xf32>
    %cst_41 = arith.constant 0.000000e+00 : f32
    %178 = vector.broadcast %cst_41 : f32 to vector<16x32xf32>
    %179 = arith.maximumf %177, %178 : vector<16x32xf32>
    %180 = arith.addf %174, %179 : vector<16x32xf32>
    %cst_42 = arith.constant dense<0.000000e+00> : vector<16xf32>
    %181 = vector.multi_reduction <add>, %180, %cst_42 [1] : vector<16x32xf32> to vector<16xf32>
    %182 = vector.shape_cast %181 : vector<16xf32> to vector<16x1xf32>
    %cst_43 = arith.constant 3.200000e+01 : f32
    %183 = vector.broadcast %cst_43 : f32 to vector<16x1xf32>
    %184 = arith.divf %182, %183 : vector<16x1xf32>
    %185 = vector.broadcast %184 : vector<16x1xf32> to vector<16x32xf32>
    %186 = arith.subf %180, %185 : vector<16x32xf32>
    %187 = arith.mulf %186, %186 : vector<16x32xf32>
    %cst_44 = arith.constant dense<0.000000e+00> : vector<16xf32>
    %188 = vector.multi_reduction <add>, %187, %cst_44 [1] : vector<16x32xf32> to vector<16xf32>
    %189 = vector.shape_cast %188 : vector<16xf32> to vector<16x1xf32>
    %cst_45 = arith.constant 3.200000e+01 : f32
    %190 = vector.broadcast %cst_45 : f32 to vector<16x1xf32>
    %191 = arith.divf %189, %190 : vector<16x1xf32>
    %192 = vector.broadcast %184 : vector<16x1xf32> to vector<16x32xf32>
    %193 = arith.subf %180, %192 : vector<16x32xf32>
    %cst_46 = arith.constant 9.99999974E-6 : f32
    %194 = vector.broadcast %cst_46 : f32 to vector<16x1xf32>
    %195 = arith.addf %191, %194 : vector<16x1xf32>
    %196 = math.rsqrt %195 : vector<16x1xf32>
    %197 = vector.broadcast %196 : vector<16x1xf32> to vector<16x32xf32>
    %198 = arith.mulf %193, %197 : vector<16x32xf32>
    %199 = vector.broadcast %23 : vector<1x32xf32> to vector<16x32xf32>
    %200 = arith.mulf %198, %199 : vector<16x32xf32>
    %201 = vector.broadcast %24 : vector<1x32xf32> to vector<16x32xf32>
    %202 = arith.addf %200, %201 : vector<16x32xf32>
    %c0_47 = arith.constant 0 : index
    %c0_48 = arith.constant 0 : index
    %203 = vector.load %arg10[%c0_47, %c0_48] : memref<16x32xf32, #tpu.memory_space<vmem>>, vector<16x32xf32>
    tpu.vector_store %arg10[%c0_47, %c0_48], %202 {strides = array<i32>} : memref<16x32xf32, #tpu.memory_space<vmem>>, vector<16x32xf32>,
    return
  }
}

</mosaic_0001>

<llo_original>
// kernel: graph_transformer_decode_s2.1
$region0: #{graph_transformer_decode_s2.1}
  #allocation0 [shape = 'u32[]', space=smem, size = 0x4, offset = 0x4, fixed_abs, tag = 'smem constant byte address 0x4 - core index']
  #allocation1 [shape = 'u32[144,128]{1,0:T(1,128)}', space=vmem, size = 0x12000, scoped, tag = 'internal scratch']
  %s0 = inlined_call_operand.vmem [shape: f32[4,32], index: 0, kind: input, shape index: {}]
  %s1 = inlined_call_operand.vmem [shape: f32[4,1], index: 1, kind: input, shape index: {}]
  %s2 = inlined_call_operand.vmem [shape: f32[16,4], index: 2, kind: input, shape index: {}]
  %s3 = inlined_call_operand.vmem [shape: f32[16,4], index: 3, kind: input, shape index: {}]
  %s4 = inlined_call_operand.vmem [shape: f32[32,32], index: 4, kind: input, shape index: {}]
  %s5 = inlined_call_operand.vmem [shape: f32[16,16], index: 5, kind: input, shape index: {}]
  %s6 = inlined_call_operand.vmem [shape: f32[7,16], index: 6, kind: input, shape index: {}]
  %s7 = inlined_call_operand.vmem [shape: f32[16,96], index: 7, kind: input, shape index: {}]
  %s8 = inlined_call_operand.vmem [shape: f32[32,32], index: 8, kind: input, shape index: {}]
  %s9 = inlined_call_operand.vmem [shape: f32[8,32], index: 9, kind: input, shape index: {}]
  %s10 = inlined_call_operand.hbm [shape: f32[16,32], index: 10, kind: output, shape index: {}]
  %s11 = sld [smem:[#allocation0]]
  $region50: #{graph_transformer_decode_s2.1} parent=0
    _
  %s13 = ssub.s32 1, %s11
  %s14 = scalar_select 0, %s13, %s11
  $region1: #{graph_transformer_decode_s2.1} parent=0
    #allocation2 [shape = 'u8[8192]{0}', space=vmem, size = 0x2000, scoped, tag = 'output window, operand 0, single buffered']
    #allocation3 [shape = 's32[1]{0}', space=sflag, size = 0x4, scoped, tag = 'scoped memory for graph_transformer_decode_s2.1']
    %15 = vsyncpa [#allocation3], 0
    // Predicated region
    $region2: #{graph_transformer_decode_s2.1} parent=1 // pred_check
      _
    $region3: #{graph_transformer_decode_s2.1} parent=1 // pred_check_branch
      %17 = sbr.rel (0) target = $region5
    $region4: #{graph_transformer_decode_s2.1} parent=1 // pred_region
      _
    $region5: #{graph_transformer_decode_s2.1} parent=1 // pred_fallthru
      _
    // Predicated region
    $region6: #{graph_transformer_decode_s2.1} parent=1 // pred_check
      _
    $region7: #{graph_transformer_decode_s2.1} parent=1 // pred_check_branch
      %19 = sbr.rel (0) target = $region9
    $region8: #{graph_transformer_decode_s2.1} parent=1 // pred_region
      _
    $region9: #{graph_transformer_decode_s2.1} parent=1 // pred_fallthru
      _
    // Predicated region
    $region10: #{graph_transformer_decode_s2.1} parent=1 // pred_check
      _
    $region11: #{graph_transformer_decode_s2.1} parent=1 // pred_check_branch
      %21 = sbr.rel (0) target = $region13
    $region12: #{graph_transformer_decode_s2.1} parent=1 // pred_region
      _
    $region13: #{graph_transformer_decode_s2.1} parent=1 // pred_fallthru
      _
    // Predicated region
    $region14: #{graph_transformer_decode_s2.1} parent=1 // pred_check
      _
    $region15: #{graph_transformer_decode_s2.1} parent=1 // pred_check_branch
      %23 = sbr.rel (0) target = $region17
    $region16: #{graph_transformer_decode_s2.1} parent=1 // pred_region
      _
    $region17: #{graph_transformer_decode_s2.1} parent=1 // pred_fallthru
      _
    // Predicated region
    $region18: #{graph_transformer_decode_s2.1} parent=1 // pred_check
      _
    $region19: #{graph_transformer_decode_s2.1} parent=1 // pred_check_branch
      %25 = sbr.rel (0) target = $region21
    $region20: #{graph_transformer_decode_s2.1} parent=1 // pred_region
      _
    $region21: #{graph_transformer_decode_s2.1} parent=1 // pred_fallthru
      _
    // Predicated region
    $region22: #{graph_transformer_decode_s2.1} parent=1 // pred_check
      _
    $region23: #{graph_transformer_decode_s2.1} parent=1 // pred_check_branch
      %27 = sbr.rel (0) target = $region25
    $region24: #{graph_transformer_decode_s2.1} parent=1 // pred_region
      _
    $region25: #{graph_transformer_decode_s2.1} parent=1 // pred_fallthru
      _
    // Predicated region
    $region26: #{graph_transformer_decode_s2.1} parent=1 // pred_check
      _
    $region27: #{graph_transformer_decode_s2.1} parent=1 // pred_check_branch
      %29 = sbr.rel (0) target = $region29
    $region28: #{graph_transformer_decode_s2.1} parent=1 // pred_region
      _
    $region29: #{graph_transformer_decode_s2.1} parent=1 // pred_fallthru
      _
    // Predicated region
    $region30: #{graph_transformer_decode_s2.1} parent=1 // pred_check
      _
    $region31: #{graph_transformer_decode_s2.1} parent=1 // pred_check_branch
      %31 = sbr.rel (0) target = $region33
    $region32: #{graph_transformer_decode_s2.1} parent=1 // pred_region
      _
    $region33: #{graph_transformer_decode_s2.1} parent=1 // pred_fallthru
      _
    // Predicated region
    $region34: #{graph_transformer_decode_s2.1} parent=1 // pred_check
      _
    $region35: #{graph_transformer_decode_s2.1} parent=1 // pred_check_branch
      %33 = sbr.rel (0) target = $region37
    $region36: #{graph_transformer_decode_s2.1} parent=1 // pred_region
      _
    $region37: #{graph_transformer_decode_s2.1} parent=1 // pred_fallthru
      _
    // Predicated region
    $region38: #{graph_transformer_decode_s2.1} parent=1 // pred_check
      _
    $region39: #{graph_transformer_decode_s2.1} parent=1 // pred_check_branch
      %35 = sbr.rel (0) target = $region41
    $region40: #{graph_transformer_decode_s2.1} parent=1 // pred_region
      _
    $region41: #{graph_transformer_decode_s2.1} parent=1 // pred_fallthru
      _
    %v36 = vld [vmem:[%s0] sm:$0xf]
    %v37 = vld [vmem:[%s1] sm:$0xf]
    %v38 = vld [vmem:[%s2] sm:$0xff]
    %v39 = vld [vmem:[%s2 + $0x8] sm:$0xff]
    %v40 = vld [vmem:[%s3] sm:$0xff]
    %v41 = vld [vmem:[%s3 + $0x8] sm:$0xff]
    %v42 = vld [vmem:[%s4] sm:$0xff]
    %v43 = vld [vmem:[%s4 + $0x8] sm:$0xff]
    %v44 = vld [vmem:[%s4 + $0x10] sm:$0xff]
    %v45 = vld [vmem:[%s4 + $0x18] sm:$0xff]
    %v46 = vld [vmem:[%s5] sm:$0xff]
    %v47 = vld [vmem:[%s5 + $0x8] sm:$0xff]
    %v48 = vld [vmem:[%s6] sm:$0x7f]
    %v49 = vld [vmem:[%s7] sm:$0xff]
    %v50 = vld [vmem:[%s7 + $0x8] sm:$0xff]
    %v51 = vld [vmem:[%s8] sm:$0xff]
    %v52 = vld [vmem:[%s8 + $0x8] sm:$0xff]
    %v53 = vld [vmem:[%s8 + $0x10] sm:$0xff]
    %v54 = vld [vmem:[%s8 + $0x18] sm:$0xff]
    %v55 = vld [vmem:[%s9] sm:$0xff]
    %vm56 = vcmask 261120
    %v58 = vsel %vm56, %v36, 0
    %60 = vmatprep.subr.mxu0 0.0
    %61 = vmatpush1.msra.mxu0 %v42
    %62 = vmatprep.subr.mxu0 0.0
    %63 = vmatpush1.msra.mxu0 %v43
    %64 = vmatprep.subr.mxu0 0.0
    %65 = vmatpush1.msra.mxu0 %v44
    %66 = vmatprep.subr.mxu0 0.0
    %67 = vmatpush1.msra.mxu0 %v45
    %68 = vmatprep.subr.mxu0 0.0
    %69 = vmatpush1.msra.mxu0 0.0
    %70 = vmatprep.subr.mxu0 0.0
    %71 = vmatpush1.msra.mxu0 0.0
    %72 = vmatprep.subr.mxu0 0.0
    %73 = vmatpush1.msra.mxu0 0.0
    %74 = vmatprep.subr.mxu0 0.0
    %75 = vmatpush1.msra.mxu0 0.0
    %76 = vmatprep.subr.mxu0 0.0
    %77 = vmatpush1.msra.mxu0 0.0
    %78 = vmatprep.subr.mxu0 0.0
    %79 = vmatpush1.msra.mxu0 0.0
    %80 = vmatprep.subr.mxu0 0.0
    %81 = vmatpush1.msra.mxu0 0.0
    %82 = vmatprep.subr.mxu0 0.0
    %83 = vmatpush1.msra.mxu0 0.0
    %84 = vmatprep.subr.mxu0 0.0
    %85 = vmatpush1.msra.mxu0 0.0
    %86 = vmatprep.subr.mxu0 0.0
    %87 = vmatpush1.msra.mxu0 0.0
    %88 = vmatprep.subr.mxu0 0.0
    %89 = vmatpush1.msra.mxu0 0.0
    %90 = vmatprep.subr.mxu0 0.0
    %91 = vmatpush1.msra.mxu0 0.0
    %92 = vmatprep.subr.mxu0 0.0
    %93 = vmatpush1.msra.mxu0 0.0
    %94 = vmatprep.subr.mxu0 0.0
    %95 = vmatpush1.msra.mxu0 0.0
    %96 = vmatprep.subr.mxu0 0.0
    %97 = vmatpush1.msra.mxu0 0.0
    %98 = vmatprep.subr.mxu0 0.0
    %99 = vmatpush1.msra.mxu0 0.0
    %100 = vmatprep.subr.mxu0 0.0
    %101 = vmatpush1.msra.mxu0 0.0
    %102 = vmatprep.subr.mxu0 0.0
    %103 = vmatpush1.msra.mxu0 0.0
    %104 = vmatprep.subr.mxu0 0.0
    %105 = vmatpush1.msra.mxu0 0.0
    %106 = vmatprep.subr.mxu0 0.0
    %107 = vmatpush1.msra.mxu0 0.0
    %108 = vmatprep.subr.mxu0 0.0
    %109 = vmatpush1.msra.mxu0 0.0
    %110 = vmatprep.subr.mxu0 0.0
    %111 = vmatpush1.msra.mxu0 0.0
    %112 = vmatprep.subr.mxu0 0.0
    %113 = vmatpush1.msra.mxu0 0.0
    %114 = vmatprep.subr.mxu0 0.0
    %115 = vmatpush1.msra.mxu0 0.0
    %116 = vmatprep.subr.mxu0 0.0
    %117 = vmatpush1.msra.mxu0 0.0
    %118 = vmatprep.subr.mxu0 0.0
    %119 = vmatpush1.msra.mxu0 0.0
    %120 = vmatprep.subr.mxu0 0.0
    %121 = vmatpush1.msra.mxu0 0.0
    %122 = vmatprep.subr.mxu0 0.0
    %123 = vmatpush1.msra.mxu0 0.0
    %124 = vmatprep.mubr.f32.mxu0 0.0
    %125 = vmatmul.mubr.f32.gmra.mrb[0].mxu0 %v58
    %v126 = vpop.f32.mrb[0].mxu0
    %v127 = vadd.f32 0.0, %v126
    %v128 = vpop.f32.mrb[0].mxu0
    %129 = vdwg.mxu0
    %v130 = vlaneseq
    %v131 = vshrl.u32 %v130, 7
    %v132 = vsub.s32 1, %v131
    %v133 = vrot.slane %v48, %v132
    %135 = vrot.lane.b32.xlu0 %v133, 16
    %v136 = vpop.permute.xlu0 %135
    %v138 = vadd.f32 %v127, %v136
    %140 = vset.pattern.permute.xlu0 0
    %141 = vperm.xlu0 %140, %v37
    %v142 = vpop.permute.xlu0 %141
    %v144 = vmul.f32 %v142, %v127
    %v145 = vlaneseq
    %v146 = vshrl.u32 %v145, 7
    %v147 = vsub.s32 0, %v146
    %v148 = vrot.slane %v48, %v147
    %v149 = vadd.f32 %v144, %v148
    %151 = vrot.lane.b32.xlu0 %v138, 112
    %v152 = vpop.permute.xlu0 %151
    %v154 = vadd.f32 %v149, %v152
    %vm155 = vcmask 125952
    %v156 = vsel %vm155, %v154, 0.0
    %157 = vadd.xlane.f32.xlu0 %v156
    %v158 = vpop.xlane.xlu0 %157
    %v159 = vrcp.pop 16.0
    %v160 = vmul.f32 %v158, %v159
    %v161 = vsub.f32 %v154, %v160
    %v162 = vmul.f32 %v161, %v161
    %v163 = vsel %vm155, %v162, 0.0
    %164 = vadd.xlane.f32.xlu0 %v163
    %v165 = vpop.xlane.xlu0 %164
    %v166 = vmul.f32 %v165, %v159
    %v167 = vadd.f32 %v166, 1e-05
    %v168 = vrsqrt.pop %v167
    %v169 = vmul.f32 %v161, %v168
    %v170 = vlaneseq
    %v171 = vshrl.u32 %v170, 7
    %v172 = vsub.s32 3, %v171
    %v173 = vrot.slane %v48, %v172
    %v174 = vmul.f32 %v169, %v173
    %v175 = vlaneseq
    %v176 = vshrl.u32 %v175, 7
    %v177 = vsub.s32 4, %v176
    %v178 = vrot.slane %v48, %v177
    %v179 = vadd.f32 %v174, %v178
    %v180 = vlaneseq
    %v181 = vshrl.u32 %v180, 7
    %v182 = vsub.s32 2, %v181
    %v183 = vrot.slane %v48, %v182
    %vm184 = vcmask 130048
    %v186 = vsel %vm184, %v179, 0
    %188 = vmatprep.subr.mxu0 0.0
    %189 = vmatpush1.msra.mxu0 %v46
    %190 = vmatprep.subr.mxu0 0.0
    %191 = vmatpush1.msra.mxu0 %v47
    %192 = vmatprep.subr.mxu0 0.0
    %193 = vmatpush1.msra.mxu0 0.0
    %194 = vmatprep.subr.mxu0 0.0
    %195 = vmatpush1.msra.mxu0 0.0
    %196 = vmatprep.subr.mxu0 0.0
    %197 = vmatpush1.msra.mxu0 0.0
    %198 = vmatprep.subr.mxu0 0.0
    %199 = vmatpush1.msra.mxu0 0.0
    %200 = vmatprep.subr.mxu0 0.0
    %201 = vmatpush1.msra.mxu0 0.0
    %202 = vmatprep.subr.mxu0 0.0
    %203 = vmatpush1.msra.mxu0 0.0
    %204 = vmatprep.subr.mxu0 0.0
    %205 = vmatpush1.msra.mxu0 0.0
    %206 = vmatprep.subr.mxu0 0.0
    %207 = vmatpush1.msra.mxu0 0.0
    %208 = vmatprep.subr.mxu0 0.0
    %209 = vmatpush1.msra.mxu0 0.0
    %210 = vmatprep.subr.mxu0 0.0
    %211 = vmatpush1.msra.mxu0 0.0
    %212 = vmatprep.subr.mxu0 0.0
    %213 = vmatpush1.msra.mxu0 0.0
    %214 = vmatprep.subr.mxu0 0.0
    %215 = vmatpush1.msra.mxu0 0.0
    %216 = vmatprep.subr.mxu0 0.0
    %217 = vmatpush1.msra.mxu0 0.0
    %218 = vmatprep.subr.mxu0 0.0
    %219 = vmatpush1.msra.mxu0 0.0
    %220 = vmatprep.subr.mxu0 0.0
    %221 = vmatpush1.msra.mxu0 0.0
    %222 = vmatprep.subr.mxu0 0.0
    %223 = vmatpush1.msra.mxu0 0.0
    %224 = vmatprep.subr.mxu0 0.0
    %225 = vmatpush1.msra.mxu0 0.0
    %226 = vmatprep.subr.mxu0 0.0
    %227 = vmatpush1.msra.mxu0 0.0
    %228 = vmatprep.subr.mxu0 0.0
    %229 = vmatpush1.msra.mxu0 0.0
    %230 = vmatprep.subr.mxu0 0.0
    %231 = vmatpush1.msra.mxu0 0.0
    %232 = vmatprep.subr.mxu0 0.0
    %233 = vmatpush1.msra.mxu0 0.0
    %234 = vmatprep.subr.mxu0 0.0
    %235 = vmatpush1.msra.mxu0 0.0
    %236 = vmatprep.subr.mxu0 0.0
    %237 = vmatpush1.msra.mxu0 0.0
    %238 = vmatprep.subr.mxu0 0.0
    %239 = vmatpush1.msra.mxu0 0.0
    %240 = vmatprep.subr.mxu0 0.0
    %241 = vmatpush1.msra.mxu0 0.0
    %242 = vmatprep.subr.mxu0 0.0
    %243 = vmatpush1.msra.mxu0 0.0
    %244 = vmatprep.subr.mxu0 0.0
    %245 = vmatpush1.msra.mxu0 0.0
    %246 = vmatprep.subr.mxu0 0.0
    %247 = vmatpush1.msra.mxu0 0.0
    %248 = vmatprep.subr.mxu0 0.0
    %249 = vmatpush1.msra.mxu0 0.0
    %250 = vmatprep.subr.mxu0 0.0
    %251 = vmatpush1.msra.mxu0 0.0
    %252 = vmatprep.mubr.f32.mxu0 0.0
    %253 = vmatmul.mubr.f32.gmra.mrb[0].mxu0 %v186
    %v254 = vpop.f32.mrb[0].mxu0
    %v255 = vadd.f32 %v183, %v254
    %v256 = vpop.f32.mrb[0].mxu0
    %257 = vdwg.mxu0
    %v258 = vmax.f32 %v255, 0.0
    %v259 = vadd.f32 %v179, %v258
    %v260 = vsel %vm155, %v259, 0.0
    %261 = vadd.xlane.f32.xlu0 %v260
    %v262 = vpop.xlane.xlu0 %261
    %v263 = vmul.f32 %v262, %v159
    %v264 = vsub.f32 %v259, %v263
    %v265 = vmul.f32 %v264, %v264
    %v266 = vsel %vm155, %v265, 0.0
    %267 = vadd.xlane.f32.xlu0 %v266
    %v268 = vpop.xlane.xlu0 %267
    %v269 = vmul.f32 %v268, %v159
    %v270 = vadd.f32 %v269, 1e-05
    %v271 = vrsqrt.pop %v270
    %v272 = vmul.f32 %v264, %v271
    %v273 = vlaneseq
    %v274 = vshrl.u32 %v273, 7
    %v275 = vsub.s32 5, %v274
    %v276 = vrot.slane %v48, %v275
    %v277 = vmul.f32 %v272, %v276
    %v278 = vlaneseq
    %v279 = vshrl.u32 %v278, 7
    %v280 = vsub.s32 6, %v279
    %v281 = vrot.slane %v48, %v280
    %v282 = vadd.f32 %v277, %v281
    %v284 = vsel %vm184, %v282, 0
    %286 = vmatprep.subr.mxu0 0.0
    %287 = vmatpush1.msra.mxu0 %v49
    %288 = vmatprep.subr.mxu0 0.0
    %289 = vmatpush1.msra.mxu0 %v50
    %290 = vmatprep.subr.mxu0 0.0
    %291 = vmatpush1.msra.mxu0 0.0
    %292 = vmatprep.subr.mxu0 0.0
    %293 = vmatpush1.msra.mxu0 0.0
    %294 = vmatprep.subr.mxu0 0.0
    %295 = vmatpush1.msra.mxu0 0.0
    %296 = vmatprep.subr.mxu0 0.0
    %297 = vmatpush1.msra.mxu0 0.0
    %298 = vmatprep.subr.mxu0 0.0
    %299 = vmatpush1.msra.mxu0 0.0
    %300 = vmatprep.subr.mxu0 0.0
    %301 = vmatpush1.msra.mxu0 0.0
    %302 = vmatprep.subr.mxu0 0.0
    %303 = vmatpush1.msra.mxu0 0.0
    %304 = vmatprep.subr.mxu0 0.0
    %305 = vmatpush1.msra.mxu0 0.0
    %306 = vmatprep.subr.mxu0 0.0
    %307 = vmatpush1.msra.mxu0 0.0
    %308 = vmatprep.subr.mxu0 0.0
    %309 = vmatpush1.msra.mxu0 0.0
    %310 = vmatprep.subr.mxu0 0.0
    %311 = vmatpush1.msra.mxu0 0.0
    %312 = vmatprep.subr.mxu0 0.0
    %313 = vmatpush1.msra.mxu0 0.0
    %314 = vmatprep.subr.mxu0 0.0
    %315 = vmatpush1.msra.mxu0 0.0
    %316 = vmatprep.subr.mxu0 0.0
    %317 = vmatpush1.msra.mxu0 0.0
    %318 = vmatprep.subr.mxu0 0.0
    %319 = vmatpush1.msra.mxu0 0.0
    %320 = vmatprep.subr.mxu0 0.0
    %321 = vmatpush1.msra.mxu0 0.0
    %322 = vmatprep.subr.mxu0 0.0
    %323 = vmatpush1.msra.mxu0 0.0
    %324 = vmatprep.subr.mxu0 0.0
    %325 = vmatpush1.msra.mxu0 0.0
    %326 = vmatprep.subr.mxu0 0.0
    %327 = vmatpush1.msra.mxu0 0.0
    %328 = vmatprep.subr.mxu0 0.0
    %329 = vmatpush1.msra.mxu0 0.0
    %330 = vmatprep.subr.mxu0 0.0
    %331 = vmatpush1.msra.mxu0 0.0
    %332 = vmatprep.subr.mxu0 0.0
    %333 = vmatpush1.msra.mxu0 0.0
    %334 = vmatprep.subr.mxu0 0.0
    %335 = vmatpush1.msra.mxu0 0.0
    %336 = vmatprep.subr.mxu0 0.0
    %337 = vmatpush1.msra.mxu0 0.0
    %338 = vmatprep.subr.mxu0 0.0
    %339 = vmatpush1.msra.mxu0 0.0
    %340 = vmatprep.subr.mxu0 0.0
    %341 = vmatpush1.msra.mxu0 0.0
    %342 = vmatprep.subr.mxu0 0.0
    %343 = vmatpush1.msra.mxu0 0.0
    %344 = vmatprep.subr.mxu0 0.0
    %345 = vmatpush1.msra.mxu0 0.0
    %346 = vmatprep.subr.mxu0 0.0
    %347 = vmatpush1.msra.mxu0 0.0
    %348 = vmatprep.subr.mxu0 0.0
    %349 = vmatpush1.msra.mxu0 0.0
    %350 = vmatprep.mubr.f32.mxu0 0.0
    %351 = vmatmul.mubr.f32.gmra.mrb[0].mxu0 %v284
    %v352 = vpop.f32.mrb[0].mxu0
    %v353 = vadd.f32 0.0, %v352
    %v354 = vpop.f32.mrb[0].mxu0
    %355 = vdwg.mxu0
    %v356 = vlaneseq
    %v357 = vshrl.u32 %v356, 7
    %v358 = vsub.s32 1, %v357
    %v359 = vrot.slane %v55, %v358
    %361 = vrot.lane.b32.xlu0 %v359, 32
    %v362 = vpop.permute.xlu0 %361
    %v364 = vadd.f32 %v353, %v362
    %v365 = vlaneseq
    %v366 = vshrl.u32 %v365, 7
    %v367 = vsub.s32 2, %v366
    %v368 = vrot.slane %v55, %v367
    %370 = vrot.lane.b32.xlu0 %v368, 64
    %v371 = vpop.permute.xlu0 %370
    %v373 = vadd.f32 %v353, %v371
    %375 = vset.pattern.permute.xlu0 0
    %376 = vperm.xlu0 %375, %v38
    %v377 = vpop.permute.xlu0 %376
    %380 = vset.pattern.permute.xlu0 0
    %381 = vperm.xlu0 %380, %v39
    %v382 = vpop.permute.xlu0 %381
    %v384 = vlaneseq
    %v385 = vshrl.u32 %v384, 7
    %v386 = vsub.s32 0, %v385
    %v387 = vrot.slane %v353, %v386
    %v388 = vmul.f32 %v377, %v387
    %v389 = vmul.f32 %v382, %v387
    %v390 = vlaneseq
    %v391 = vshrl.u32 %v390, 7
    %v392 = vsub.s32 0, %v391
    %v393 = vrot.slane %v55, %v392
    %v394 = vadd.f32 %v388, %v393
    %v395 = vadd.f32 %v389, %v393
    %396 = vset.pattern.permute.xlu0 1
    %397 = vperm.xlu0 %396, %v38
    %v398 = vpop.permute.xlu0 %397
    %400 = vset.pattern.permute.xlu0 1
    %401 = vperm.xlu0 %400, %v39
    %v402 = vpop.permute.xlu0 %401
    %v404 = vlaneseq
    %v405 = vshrl.u32 %v404, 7
    %v406 = vsub.s32 1, %v405
    %v407 = vrot.slane %v353, %v406
    %v408 = vmul.f32 %v398, %v407
    %v409 = vmul.f32 %v402, %v407
    %v410 = vadd.f32 %v394, %v408
    %v411 = vadd.f32 %v395, %v409
    %412 = vset.pattern.permute.xlu0 2
    %413 = vperm.xlu0 %412, %v38
    %v414 = vpop.permute.xlu0 %413
    %416 = vset.pattern.permute.xlu0 2
    %417 = vperm.xlu0 %416, %v39
    %v418 = vpop.permute.xlu0 %417
    %v420 = vlaneseq
    %v421 = vshrl.u32 %v420, 7
    %v422 = vsub.s32 2, %v421
    %v423 = vrot.slane %v353, %v422
    %v424 = vmul.f32 %v414, %v423
    %v425 = vmul.f32 %v418, %v423
    %v426 = vadd.f32 %v410, %v424
    %v427 = vadd.f32 %v411, %v425
    %428 = vset.pattern.permute.xlu0 3
    %429 = vperm.xlu0 %428, %v38
    %v430 = vpop.permute.xlu0 %429
    %432 = vset.pattern.permute.xlu0 3
    %433 = vperm.xlu0 %432, %v39
    %v434 = vpop.permute.xlu0 %433
    %v436 = vlaneseq
    %v437 = vshrl.u32 %v436, 7
    %v438 = vsub.s32 3, %v437
    %v439 = vrot.slane %v353, %v438
    %v440 = vmul.f32 %v430, %v439
    %v441 = vmul.f32 %v434, %v439
    %v442 = vadd.f32 %v426, %v440
    %v443 = vadd.f32 %v427, %v441
    %445 = vrot.lane.b32.xlu0 %v364, 96
    %v446 = vpop.permute.xlu0 %445
    %v448 = vsel %vm56, %v442, 0
    %v451 = vsel %vm56, %v443, 0
    %v453 = vsel %vm56, %v446, 0
    %455 = vmatprep.subr.mxu0 0.0
    %456 = vmatpush1.xpose.msra.mxu0 %v453
    %457 = vmatprep.subr.mxu0 0.0
    %458 = vmatpush1.xpose.msra.mxu0 0.0
    %459 = vmatprep.subr.mxu0 0.0
    %460 = vmatpush1.xpose.msra.mxu0 0.0
    %461 = vmatprep.subr.mxu0 0.0
    %462 = vmatpush1.xpose.msra.mxu0 0.0
    %463 = vmatprep.subr.mxu0 0.0
    %464 = vmatpush1.xpose.msra.mxu0 0.0
    %465 = vmatprep.subr.mxu0 0.0
    %466 = vmatpush1.xpose.msra.mxu0 0.0
    %467 = vmatprep.subr.mxu0 0.0
    %468 = vmatpush1.xpose.msra.mxu0 0.0
    %469 = vmatprep.subr.mxu0 0.0
    %470 = vmatpush1.xpose.msra.mxu0 0.0
    %471 = vmatprep.subr.mxu0 0.0
    %472 = vmatpush1.xpose.msra.mxu0 0.0
    %473 = vmatprep.subr.mxu0 0.0
    %474 = vmatpush1.xpose.msra.mxu0 0.0
    %475 = vmatprep.subr.mxu0 0.0
    %476 = vmatpush1.xpose.msra.mxu0 0.0
    %477 = vmatprep.subr.mxu0 0.0
    %478 = vmatpush1.xpose.msra.mxu0 0.0
    %479 = vmatprep.subr.mxu0 0.0
    %480 = vmatpush1.xpose.msra.mxu0 0.0
    %481 = vmatprep.subr.mxu0 0.0
    %482 = vmatpush1.xpose.msra.mxu0 0.0
    %483 = vmatprep.subr.mxu0 0.0
    %484 = vmatpush1.xpose.msra.mxu0 0.0
    %485 = vmatprep.subr.mxu0 0.0
    %486 = vmatpush1.xpose.msra.mxu0 0.0
    %487 = vmatprep.subr.mxu0 0.0
    %488 = vmatpush1.xpose.msra.mxu0 0.0
    %489 = vmatprep.subr.mxu0 0.0
    %490 = vmatpush1.xpose.msra.mxu0 0.0
    %491 = vmatprep.subr.mxu0 0.0
    %492 = vmatpush1.xpose.msra.mxu0 0.0
    %493 = vmatprep.subr.mxu0 0.0
    %494 = vmatpush1.xpose.msra.mxu0 0.0
    %495 = vmatprep.subr.mxu0 0.0
    %496 = vmatpush1.xpose.msra.mxu0 0.0
    %497 = vmatprep.subr.mxu0 0.0
    %498 = vmatpush1.xpose.msra.mxu0 0.0
    %499 = vmatprep.subr.mxu0 0.0
    %500 = vmatpush1.xpose.msra.mxu0 0.0
    %501 = vmatprep.subr.mxu0 0.0
    %502 = vmatpush1.xpose.msra.mxu0 0.0
    %503 = vmatprep.subr.mxu0 0.0
    %504 = vmatpush1.xpose.msra.mxu0 0.0
    %505 = vmatprep.subr.mxu0 0.0
    %506 = vmatpush1.xpose.msra.mxu0 0.0
    %507 = vmatprep.subr.mxu0 0.0
    %508 = vmatpush1.xpose.msra.mxu0 0.0
    %509 = vmatprep.subr.mxu0 0.0
    %510 = vmatpush1.xpose.msra.mxu0 0.0
    %511 = vmatprep.subr.mxu0 0.0
    %512 = vmatpush1.xpose.msra.mxu0 0.0
    %513 = vmatprep.subr.mxu0 0.0
    %514 = vmatpush1.xpose.msra.mxu0 0.0
    %515 = vmatprep.subr.mxu0 0.0
    %516 = vmatpush1.xpose.msra.mxu0 0.0
    %517 = vmatprep.subr.mxu0 0.0
    %518 = vmatpush1.xpose.msra.mxu0 0.0
    %519 = vmatprep.mubr.f32.mxu0 0.0
    %520 = vmatmul.mubr.f32.gmra.mrb[0].mxu0 %v448
    %v521 = vpop.f32.mrb[0].mxu0
    %v522 = vadd.f32 %v40, %v521
    %v523 = vpop.f32.mrb[0].mxu0
    %524 = vmatprep.mubr.f32.mxu0 0.0
    %525 = vmatmul.mubr.f32.gmra.mrb[0].mxu0 %v451
    %v526 = vpop.f32.mrb[0].mxu0
    %v527 = vadd.f32 %v41, %v526
    %v528 = vpop.f32.mrb[0].mxu0
    %529 = vdwg.mxu0
    %vm530 = vcmask 31744
    %v531 = vsel %vm530, %v522, -inf
    %532 = vmax.xlane.f32.xlu0 %v531
    %v533 = vpop.xlane.xlu0 %532
    %v534 = vsel %vm530, %v527, -inf
    %535 = vmax.xlane.f32.xlu0 %v534
    %v536 = vpop.xlane.xlu0 %535
    %v537 = vsub.f32 %v522, %v533
    %v538 = vsub.f32 %v527, %v536
    %v539 = vmul.f32 %v537, 1.442695
    %v540 = vpow.pop %v539
    %v541 = vmul.f32 %v538, 1.442695
    %v542 = vpow.pop %v541
    %v543 = vsel %vm530, %v540, 0.0
    %544 = vadd.xlane.f32.xlu0 %v543
    %v545 = vpop.xlane.xlu0 %544
    %v546 = vsel %vm530, %v542, 0.0
    %547 = vadd.xlane.f32.xlu0 %v546
    %v548 = vpop.xlane.xlu0 %547
    %v549 = vrcp.pop %v545
    %v550 = vmul.f32 %v540, %v549
    %v551 = vrcp.pop %v548
    %v552 = vmul.f32 %v542, %v551
    %554 = vset.pattern.permute.xlu0 0
    %555 = vperm.xlu0 %554, %v550
    %v556 = vpop.permute.xlu0 %555
    %559 = vset.pattern.permute.xlu0 0
    %560 = vperm.xlu0 %559, %v552
    %v561 = vpop.permute.xlu0 %560
    %v563 = vlaneseq
    %v564 = vshrl.u32 %v563, 7
    %v565 = vsub.s32 0, %v564
    %v566 = vrot.slane %v373, %v565
    %v567 = vmul.f32 %v556, %v566
    %v568 = vmul.f32 %v561, %v566
    %571 = vrot.lane.b32.xlu0 %v567, 64
    %v572 = vpop.permute.xlu0 %571
    %573 = vrot.lane.b32.xlu0 %v568, 64
    %v574 = vpop.permute.xlu0 %573
    %v577 = vadd.f32 %v442, %v572
    %v578 = vadd.f32 %v443, %v574
    %579 = vset.pattern.permute.xlu0 1
    %580 = vperm.xlu0 %579, %v550
    %v581 = vpop.permute.xlu0 %580
    %583 = vset.pattern.permute.xlu0 1
    %584 = vperm.xlu0 %583, %v552
    %v585 = vpop.permute.xlu0 %584
    %v587 = vlaneseq
    %v588 = vshrl.u32 %v587, 7
    %v589 = vsub.s32 1, %v588
    %v590 = vrot.slane %v373, %v589
    %v591 = vmul.f32 %v581, %v590
    %v592 = vmul.f32 %v585, %v590
    %595 = vrot.lane.b32.xlu0 %v591, 64
    %v596 = vpop.permute.xlu0 %595
    %597 = vrot.lane.b32.xlu0 %v592, 64
    %v598 = vpop.permute.xlu0 %597
    %v601 = vadd.f32 %v577, %v596
    %v602 = vadd.f32 %v578, %v598
    %603 = vset.pattern.permute.xlu0 2
    %604 = vperm.xlu0 %603, %v550
    %v605 = vpop.permute.xlu0 %604
    %607 = vset.pattern.permute.xlu0 2
    %608 = vperm.xlu0 %607, %v552
    %v609 = vpop.permute.xlu0 %608
    %v611 = vlaneseq
    %v612 = vshrl.u32 %v611, 7
    %v613 = vsub.s32 2, %v612
    %v614 = vrot.slane %v373, %v613
    %v615 = vmul.f32 %v605, %v614
    %v616 = vmul.f32 %v609, %v614
    %619 = vrot.lane.b32.xlu0 %v615, 64
    %v620 = vpop.permute.xlu0 %619
    %621 = vrot.lane.b32.xlu0 %v616, 64
    %v622 = vpop.permute.xlu0 %621
    %v625 = vadd.f32 %v601, %v620
    %v626 = vadd.f32 %v602, %v622
    %627 = vset.pattern.permute.xlu0 3
    %628 = vperm.xlu0 %627, %v550
    %v629 = vpop.permute.xlu0 %628
    %631 = vset.pattern.permute.xlu0 3
    %632 = vperm.xlu0 %631, %v552
    %v633 = vpop.permute.xlu0 %632
    %v635 = vlaneseq
    %v636 = vshrl.u32 %v635, 7
    %v637 = vsub.s32 3, %v636
    %v638 = vrot.slane %v373, %v637
    %v639 = vmul.f32 %v629, %v638
    %v640 = vmul.f32 %v633, %v638
    %643 = vrot.lane.b32.xlu0 %v639, 64
    %v644 = vpop.permute.xlu0 %643
    %645 = vrot.lane.b32.xlu0 %v640, 64
    %v646 = vpop.permute.xlu0 %645
    %v649 = vadd.f32 %v625, %v644
    %v650 = vadd.f32 %v626, %v646
    %v651 = vsel %vm56, %v649, 0.0
    %652 = vadd.xlane.f32.xlu0 %v651
    %v653 = vpop.xlane.xlu0 %652
    %v654 = vsel %vm56, %v650, 0.0
    %655 = vadd.xlane.f32.xlu0 %v654
    %v656 = vpop.xlane.xlu0 %655
    %v657 = vrcp.pop 32.0
    %v658 = vmul.f32 %v653, %v657
    %v659 = vmul.f32 %v656, %v657
    %v660 = vsub.f32 %v649, %v658
    %v661 = vsub.f32 %v650, %v659
    %v662 = vmul.f32 %v660, %v660
    %v663 = vmul.f32 %v661, %v661
    %v664 = vsel %vm56, %v662, 0.0
    %665 = vadd.xlane.f32.xlu0 %v664
    %v666 = vpop.xlane.xlu0 %665
    %v667 = vsel %vm56, %v663, 0.0
    %668 = vadd.xlane.f32.xlu0 %v667
    %v669 = vpop.xlane.xlu0 %668
    %v670 = vmul.f32 %v666, %v657
    %v671 = vmul.f32 %v669, %v657
    %v672 = vadd.f32 %v670, 1e-05
    %v673 = vadd.f32 %v671, 1e-05
    %v674 = vrsqrt.pop %v672
    %v675 = vrsqrt.pop %v673
    %v676 = vmul.f32 %v660, %v674
    %v677 = vmul.f32 %v661, %v675
    %v678 = vlaneseq
    %v679 = vshrl.u32 %v678, 7
    %v680 = vsub.s32 4, %v679
    %v681 = vrot.slane %v55, %v680
    %v682 = vmul.f32 %v676, %v681
    %v683 = vmul.f32 %v677, %v681
    %v684 = vlaneseq
    %v685 = vshrl.u32 %v684, 7
    %v686 = vsub.s32 5, %v685
    %v687 = vrot.slane %v55, %v686
    %v688 = vadd.f32 %v682, %v687
    %v689 = vadd.f32 %v683, %v687
    %v690 = vlaneseq
    %v691 = vshrl.u32 %v690, 7
    %v692 = vsub.s32 3, %v691
    %v693 = vrot.slane %v55, %v692
    %v695 = vsel %vm56, %v688, 0
    %v698 = vsel %vm56, %v689, 0
    %700 = vmatprep.subr.mxu0 0.0
    %701 = vmatpush1.msra.mxu0 %v51
    %702 = vmatprep.subr.mxu0 0.0
    %703 = vmatpush1.msra.mxu0 %v52
    %704 = vmatprep.subr.mxu0 0.0
    %705 = vmatpush1.msra.mxu0 %v53
    %706 = vmatprep.subr.mxu0 0.0
    %707 = vmatpush1.msra.mxu0 %v54
    %708 = vmatprep.subr.mxu0 0.0
    %709 = vmatpush1.msra.mxu0 0.0
    %710 = vmatprep.subr.mxu0 0.0
    %711 = vmatpush1.msra.mxu0 0.0
    %712 = vmatprep.subr.mxu0 0.0
    %713 = vmatpush1.msra.mxu0 0.0
    %714 = vmatprep.subr.mxu0 0.0
    %715 = vmatpush1.msra.mxu0 0.0
    %716 = vmatprep.subr.mxu0 0.0
    %717 = vmatpush1.msra.mxu0 0.0
    %718 = vmatprep.subr.mxu0 0.0
    %719 = vmatpush1.msra.mxu0 0.0
    %720 = vmatprep.subr.mxu0 0.0
    %721 = vmatpush1.msra.mxu0 0.0
    %722 = vmatprep.subr.mxu0 0.0
    %723 = vmatpush1.msra.mxu0 0.0
    %724 = vmatprep.subr.mxu0 0.0
    %725 = vmatpush1.msra.mxu0 0.0
    %726 = vmatprep.subr.mxu0 0.0
    %727 = vmatpush1.msra.mxu0 0.0
    %728 = vmatprep.subr.mxu0 0.0
    %729 = vmatpush1.msra.mxu0 0.0
    %730 = vmatprep.subr.mxu0 0.0
    %731 = vmatpush1.msra.mxu0 0.0
    %732 = vmatprep.subr.mxu0 0.0
    %733 = vmatpush1.msra.mxu0 0.0
    %734 = vmatprep.subr.mxu0 0.0
    %735 = vmatpush1.msra.mxu0 0.0
    %736 = vmatprep.subr.mxu0 0.0
    %737 = vmatpush1.msra.mxu0 0.0
    %738 = vmatprep.subr.mxu0 0.0
    %739 = vmatpush1.msra.mxu0 0.0
    %740 = vmatprep.subr.mxu0 0.0
    %741 = vmatpush1.msra.mxu0 0.0
    %742 = vmatprep.subr.mxu0 0.0
    %743 = vmatpush1.msra.mxu0 0.0
    %744 = vmatprep.subr.mxu0 0.0
    %745 = vmatpush1.msra.mxu0 0.0
    %746 = vmatprep.subr.mxu0 0.0
    %747 = vmatpush1.msra.mxu0 0.0
    %748 = vmatprep.subr.mxu0 0.0
    %749 = vmatpush1.msra.mxu0 0.0
    %750 = vmatprep.subr.mxu0 0.0
    %751 = vmatpush1.msra.mxu0 0.0
    %752 = vmatprep.subr.mxu0 0.0
    %753 = vmatpush1.msra.mxu0 0.0
    %754 = vmatprep.subr.mxu0 0.0
    %755 = vmatpush1.msra.mxu0 0.0
    %756 = vmatprep.subr.mxu0 0.0
    %757 = vmatpush1.msra.mxu0 0.0
    %758 = vmatprep.subr.mxu0 0.0
    %759 = vmatpush1.msra.mxu0 0.0
    %760 = vmatprep.subr.mxu0 0.0
    %761 = vmatpush1.msra.mxu0 0.0
    %762 = vmatprep.subr.mxu0 0.0
    %763 = vmatpush1.msra.mxu0 0.0
    %764 = vmatprep.mubr.f32.mxu0 0.0
    %765 = vmatmul.mubr.f32.gmra.mrb[0].mxu0 %v695
    %v766 = vpop.f32.mrb[0].mxu0
    %v767 = vadd.f32 %v693, %v766
    %v768 = vpop.f32.mrb[0].mxu0
    %769 = vmatprep.mubr.f32.mxu0 0.0
    %770 = vmatmul.mubr.f32.gmra.mrb[0].mxu0 %v698
    %v771 = vpop.f32.mrb[0].mxu0
    %v772 = vadd.f32 %v693, %v771
    %v773 = vpop.f32.mrb[0].mxu0
    %774 = vdwg.mxu0
    %v775 = vmax.f32 %v767, 0.0
    %v776 = vmax.f32 %v772, 0.0
    %v777 = vadd.f32 %v688, %v775
    %v778 = vadd.f32 %v689, %v776
    %v779 = vsel %vm56, %v777, 0.0
    %780 = vadd.xlane.f32.xlu0 %v779
    %v781 = vpop.xlane.xlu0 %780
    %v782 = vsel %vm56, %v778, 0.0
    %783 = vadd.xlane.f32.xlu0 %v782
    %v784 = vpop.xlane.xlu0 %783
    %v785 = vmul.f32 %v781, %v657
    %v786 = vmul.f32 %v784, %v657
    %v787 = vsub.f32 %v777, %v785
    %v788 = vsub.f32 %v778, %v786
    %v789 = vmul.f32 %v787, %v787
    %v790 = vmul.f32 %v788, %v788
    %v791 = vsel %vm56, %v789, 0.0
    %792 = vadd.xlane.f32.xlu0 %v791
    %v793 = vpop.xlane.xlu0 %792
    %v794 = vsel %vm56, %v790, 0.0
    %795 = vadd.xlane.f32.xlu0 %v794
    %v796 = vpop.xlane.xlu0 %795
    %v797 = vmul.f32 %v793, %v657
    %v798 = vmul.f32 %v796, %v657
    %v799 = vadd.f32 %v797, 1e-05
    %v800 = vadd.f32 %v798, 1e-05
    %v801 = vrsqrt.pop %v799
    %v802 = vrsqrt.pop %v800
    %v803 = vmul.f32 %v787, %v801
    %v804 = vmul.f32 %v788, %v802
    %v805 = vlaneseq
    %v806 = vshrl.u32 %v805, 7
    %v807 = vsub.s32 6, %v806
    %v808 = vrot.slane %v55, %v807
    %v809 = vmul.f32 %v803, %v808
    %v810 = vmul.f32 %v804, %v808
    %v811 = vlaneseq
    %v812 = vshrl.u32 %v811, 7
    %v813 = vsub.s32 7, %v812
    %v814 = vrot.slane %v55, %v813
    %v815 = vadd.f32 %v809, %v814
    %v816 = vadd.f32 %v810, %v814
    %817 = vst.msk [vmem:[#allocation2] sm:$0xff] %vm56, %v815
    %818 = vst.msk [vmem:[#allocation2 + $0x8] sm:$0xff] %vm56, %v816
    // Predicated region
    $region42: #{graph_transformer_decode_s2.1} parent=1 // pred_check
      _
    $region43: #{graph_transformer_decode_s2.1} parent=1 // pred_check_branch
      %820 = sbr.rel (0) target = $region45
    $region44: #{graph_transformer_decode_s2.1} parent=1 // pred_region
      %s822 = ssub.s32 256, 256
      %823 = vsyncadd [#allocation3], %s822
      %s824 = sshll.u32 [#allocation2], 4
      %s825 = int_to_ptr.vmem [resolvable:$true] %s824
      %830 = dma.vmem_to_hbm [thread:$0]  %s825, 256, %s10, [#allocation3], 128, 128, 8
    $region45: #{graph_transformer_decode_s2.1} parent=1 // pred_fallthru
      _
    // Predicated region
    $region46: #{graph_transformer_decode_s2.1} parent=1 // pred_check
      _
    $region47: #{graph_transformer_decode_s2.1} parent=1 // pred_check_branch
      %832 = sbr.rel (0) target = $region49
    $region48: #{graph_transformer_decode_s2.1} parent=1 // pred_region
      %833 = dma.done [#allocation3], 256
    $region49: #{graph_transformer_decode_s2.1} parent=1 // pred_fallthru
      _
    %834 = vsyncpa [#allocation3], 1

</llo_original>
